<compile_context>
chip_gen: v7x
topology: tpu7x:2x2x1
jax: 0.10.0
libtpu: 0.0.40
codegen_flags: <defaults>
</compile_context>

<pallas_src>
import jax
import jax.numpy as jnp
from jax.experimental import pallas as pl
from jax.experimental.pallas import tpu as pltpu

# ---- static model hyper-parameters (baked into the kernel) ----
DIN = 16                                 # input feature dim
H = 32                                   # density hidden dim == Q hidden dim
DEGREE = 2
KNOTS = (1.0 / 3.0, 2.0 / 3.0)
NUM_BASIS = DEGREE + 1 + len(KNOTS)      # d = 5
NUM_GRID = 10
G1 = NUM_GRID + 1                        # density head output dim = 11
TB_MAX = 2048                            # max batch-lane tile


def _truncated_power_basis_rows(t_row, lanes):
    """Truncated-power spline basis, batch on lanes. t_row: (1,lanes) -> (NUM_BASIS,lanes)."""
    ridx = jax.lax.broadcasted_iota(jnp.int32, (NUM_BASIS, lanes), 0)
    tb = jnp.broadcast_to(t_row, (NUM_BASIS, lanes))
    out = jnp.ones_like(tb)                               # row 0 -> 1
    for k in range(1, DEGREE + 1):                        # polynomial rows
        out = jnp.where(ridx == k, tb ** k, out)
    for j, knot in enumerate(KNOTS):                      # truncated rows
        out = jnp.where(ridx == DEGREE + 1 + j,
                        jnp.maximum(tb - knot, 0.0) ** DEGREE, out)
    return out


def vcnet_kernel(dosage_ref, x_ref,
                 w0_ref, b0_ref, w1_ref, b1_ref,
                 wm_ref, bd_ref, bq1_ref, wq2_ref, bq2_ref,
                 out_ref):
    lanes = out_ref.shape[1]                              # TB (batch on lanes)
    t = dosage_ref[...]                                   # (1, TB) f32
    xb = x_ref[...]                                       # (DIN, TB) bf16

    # ---------- hidden_features: Linear -> ReLU -> Linear; forward(): ReLU ----------
    h = jnp.dot(w0_ref[...], xb, preferred_element_type=jnp.float32) + b0_ref[...]
    h = jnp.maximum(h, 0.0)                               # (H, TB) f32
    emb = (jnp.dot(w1_ref[...], h.astype(jnp.bfloat16),
                   preferred_element_type=jnp.float32) + b1_ref[...])
    hidden = jnp.maximum(emb, 0.0)                        # (H, TB) f32
    hidden_b = hidden.astype(jnp.bfloat16)

    # ---------- single merged matmul: rows [0:160) = wq1 groups, [160:171) = wd ----------
    p = jnp.dot(wm_ref[...], hidden_b,
                preferred_element_type=jnp.float32)       # (d*H + G1, TB) f32

    # ---------- Density_Block head ----------
    logits = p[NUM_BASIS * H:, :] + bd_ref[...]           # (G1, TB)
    logits = logits - jnp.max(logits, axis=0, keepdims=True)
    e = jnp.exp(logits)
    s = jnp.sum(e, axis=0, keepdims=True)
    r = pl.reciprocal(s, approx=True)
    r = r * (2.0 - s * r)                                 # one NR step -> ~exact softmax
    sm = e * r                                            # (G1, TB)

    # comp_grid(t, num_grid), clamped, fused into one weighted reduce
    tg = t * NUM_GRID
    Uf = jnp.ceil(tg)
    inter = 1.0 - (Uf - tg)
    U = jnp.clip(Uf.astype(jnp.int32), 0, NUM_GRID)
    L = jnp.maximum(U - 1, 0)
    rows = jax.lax.broadcasted_iota(jnp.int32, sm.shape, 0)
    w_interp = (jnp.where(rows == L, 1.0 - inter, 0.0)
                + jnp.where(rows == U, inter, 0.0))
    g = jnp.sum(sm * w_interp, axis=0, keepdims=True)     # (1, TB)

    # ---------- Q head: two Dynamic_FC (varying-coefficient) layers ----------
    basis = _truncated_power_basis_rows(t, lanes)         # (d, TB) f32
    bq1v = bq1_ref[...]                                   # (H, d) f32

    # layer 1 (ind=H, outd=H, relu): basis-weighted group sum over the merged matmul
    acc = basis[0:1, :] * (p[0:H, :] + bq1v[:, 0:1])
    for k in range(1, NUM_BASIS):
        acc = acc + basis[k:k + 1, :] * (p[k * H:(k + 1) * H, :] + bq1v[:, k:k + 1])
    out1 = jnp.maximum(acc, 0.0)                          # (H, TB)

    # layer 2 (ind=H, outd=1, 'id'): one (d,H)@(H,TB) matmul + sublane reduce
    p2 = jnp.dot(wq2_ref[...], out1.astype(jnp.bfloat16),
                 preferred_element_type=jnp.float32)      # (d, TB)
    q = jnp.sum(basis * (p2 + bq2_ref[...]), axis=0, keepdims=True)   # (1, TB)

    # lane-dense output slab: row 0 = g, row 1 = Q
    out_ref[0:1, :] = g
    out_ref[1:2, :] = q


def _round_up(n, m):
    return ((n + m - 1) // m) * m


def _choose_tile(B):
    """Lane tile: multiple of 128; <= TB_MAX; >=2 grid steps whenever batch allows (v7x)."""
    if B <= TB_MAX:
        return max(128, _round_up((B + 1) // 2, 128))
    return TB_MAX


def vcnet_forward(dosage, x, packed_params):
    """dosage: (B,), x: (B, DIN). Returns (g: (B,), Q: (B, 1))."""
    B = x.shape[0]
    TB = _choose_tile(B)
    Bp = _round_up(B, TB)

    dosage_r = dosage.astype(jnp.float32).reshape(1, B)   # (1, B)
    xT = x.astype(jnp.bfloat16).T                         # (DIN, B)
    if Bp != B:                                           # pad with benign columns
        pad = Bp - B
        dosage_r = jnp.concatenate(
            [dosage_r, jnp.full((1, pad), 0.5, jnp.float32)], axis=1)
        xT = jnp.concatenate([xT, jnp.zeros((DIN, pad), jnp.bfloat16)], axis=1)

    def rep(shape):                                       # weights: one full block
        return pl.BlockSpec(shape, lambda i: (0, 0))

    in_specs = [
        pl.BlockSpec((1, TB), lambda i: (0, i)),          # dosage
        pl.BlockSpec((DIN, TB), lambda i: (0, i)),        # x^T
        rep((H, DIN)), rep((H, 1)),                       # w0^T, b0
        rep((H, H)), rep((H, 1)),                         # w1^T, b1
        rep((NUM_BASIS * H + G1, H)), rep((G1, 1)),       # [wq1-stack; wd^T], bd
        rep((H, NUM_BASIS)),                              # bq1^T
        rep((NUM_BASIS, H)), rep((NUM_BASIS, 1)),         # wq2, bq2
    ]

    out = pl.pallas_call(
        vcnet_kernel,
        grid=(Bp // TB,),
        in_specs=in_specs,
        out_specs=pl.BlockSpec((2, TB), lambda i: (0, i)),
        out_shape=jax.ShapeDtypeStruct((2, Bp), jnp.float32),
        compiler_params=pltpu.CompilerParams(
            dimension_semantics=("parallel",)),
    )(dosage_r, xT, *packed_params)

    g = out[0, :B]
    q = out[1, :B].reshape(B, 1)
    return g, q


def init_params(key):
    """Deterministic synthetic init (shapes follow Vcnet.__init__; torch-like layout)."""
    ks = jax.random.split(key, 10)
    u = lambda k, shape, s=0.1: jax.random.uniform(k, shape, jnp.float32, -s, s)
    w0, b0 = u(ks[0], (DIN, H)), u(ks[1], (1, H))
    w1, b1 = u(ks[2], (H, H)), u(ks[3], (1, H))
    wd, bd = u(ks[4], (H, G1)), u(ks[5], (1, G1))
    wq1, bq1 = u(ks[6], (NUM_BASIS, H, H)), u(ks[7], (NUM_BASIS, H))
    wq2, bq2 = u(ks[8], (NUM_BASIS, H, 1)), u(ks[9], (NUM_BASIS, 1))
    return (w0, b0, w1, b1, wd, bd, wq1, bq1, wq2, bq2)


def pack_params(raw):
    """Pack raw params into the kernel (batch-on-lanes) layout: bf16 matmul weights,
    f32 column biases, wq1 stacked row-wise and concatenated with wd^T into one weight."""
    w0, b0, w1, b1, wd, bd, wq1, bq1, wq2, bq2 = raw
    bf, f32 = jnp.bfloat16, jnp.float32
    # row k*H + j of wq1_rows = wq1[k, :, j]   -> p[k*H+j, b] = (hidden_b @ wq1[k])[b, j]
    wq1_rows = jnp.transpose(wq1, (0, 2, 1)).reshape(NUM_BASIS * H, H)
    wm = jnp.concatenate([wq1_rows, wd.T], axis=0)        # (d*H + G1, H)
    return (w0.T.astype(bf), b0.T.astype(f32),
            w1.T.astype(bf), b1.T.astype(f32),
            wm.astype(bf), bd.T.astype(f32),
            bq1.T.astype(f32),                            # (H, d)
            wq2[:, :, 0].astype(bf),                      # (d, H)
            bq2.astype(f32))                              # (d, 1)


def vcnet_reference(dosage, x, raw):
    """Pure-JAX f32 reference of the same forward pass (batch on rows)."""
    w0, b0, w1, b1, wd, bd, wq1, bq1, wq2, bq2 = raw
    t = dosage.astype(jnp.float32).reshape(-1, 1)
    xf = x.astype(jnp.float32)
    hidden = jnp.maximum(jnp.maximum(xf @ w0 + b0, 0.0) @ w1 + b1, 0.0)
    sm = jax.nn.softmax(hidden @ wd + bd, axis=1)
    tg = t * NUM_GRID
    Uf = jnp.ceil(tg)
    inter = 1.0 - (Uf - tg)
    U = jnp.clip(Uf.astype(jnp.int32), 0, NUM_GRID)
    L = jnp.maximum(U - 1, 0)
    L_out = jnp.take_along_axis(sm, L, axis=1)
    U_out = jnp.take_along_axis(sm, U, axis=1)
    g = (L_out + (U_out - L_out) * inter)[:, 0]
    cols = [jnp.ones_like(t)]
    for k in range(1, DEGREE + 1):
        cols.append(t ** k)
    for knot in KNOTS:
        cols.append(jnp.maximum(t - knot, 0.0) ** DEGREE)
    basis = jnp.concatenate(cols, axis=1)                 # (B, d)
    acc = jnp.zeros((x.shape[0], H), jnp.float32)
    for k in range(NUM_BASIS):
        acc = acc + basis[:, k:k + 1] * (hidden @ wq1[k] + bq1[k])
    out1 = jnp.maximum(acc, 0.0)
    q = jnp.zeros((x.shape[0], 1), jnp.float32)
    for k in range(NUM_BASIS):
        q = q + basis[:, k:k + 1] * (out1 @ wq2[k] + bq2[k])
    return g, q


if __name__ == "__main__":
    key = jax.random.PRNGKey(0)
    k_p, k_d, k_x = jax.random.split(key, 3)
    B = 8
    raw = init_params(k_p)
    params = pack_params(raw)
    dosage = jax.random.uniform(k_d, (B,), jnp.float32)   # treatment in [0, 1)
    x = jax.random.normal(k_x, (B, DIN), jnp.float32)

    g, Q = jax.jit(vcnet_forward)(dosage, x, params)
    jax.block_until_ready((g, Q))
    assert g.shape == (B,) and Q.shape == (B, 1)
    assert bool(jnp.all(jnp.isfinite(g))) and bool(jnp.all(jnp.isfinite(Q)))

    g_ref, Q_ref = vcnet_reference(dosage, x, raw)        # bf16-vs-f32 tolerance
    assert bool(jnp.allclose(g, g_ref, rtol=5e-2, atol=5e-3)), "g mismatch vs reference"
    assert bool(jnp.allclose(Q[:, 0], Q_ref[:, 0], rtol=5e-2, atol=5e-3)), "Q mismatch vs reference"
    print("KERNEL_OK")
</pallas_src>

<mosaic_0001>
module attributes {stable_mosaic.version = 11 : i64} {
  func.func @vcnet_kernel(%arg0: i32, %arg1: memref<1x128xf32, #tpu.memory_space<vmem>>, %arg2: memref<16x128xbf16, #tpu.memory_space<vmem>>, %arg3: memref<32x16xbf16, #tpu.memory_space<vmem>>, %arg4: memref<32x1xf32, #tpu.memory_space<vmem>>, %arg5: memref<32x32xbf16, #tpu.memory_space<vmem>>, %arg6: memref<32x1xf32, #tpu.memory_space<vmem>>, %arg7: memref<171x32xbf16, #tpu.memory_space<vmem>>, %arg8: memref<11x1xf32, #tpu.memory_space<vmem>>, %arg9: memref<32x5xf32, #tpu.memory_space<vmem>>, %arg10: memref<5x32xbf16, #tpu.memory_space<vmem>>, %arg11: memref<5x1xf32, #tpu.memory_space<vmem>>, %arg12: memref<2x128xf32, #tpu.memory_space<vmem>>) attributes {dimension_semantics = [#tpu.dimension_semantics<parallel>], iteration_bounds = array<i64: 1>, scalar_prefetch = 0 : i64, scratch_operands = 0 : i64, tpu.core_type = #tpu.core_type<tc>, window_params = [{transform_indices = @transform_0, window_bounds = array<i64: 1, 128>}, {transform_indices = @transform_1, window_bounds = array<i64: 16, 128>}, {pipeline_mode = #tpu.pipeline_mode<synchronous>, transform_indices = @transform_2, window_bounds = array<i64: 32, 16>}, {pipeline_mode = #tpu.pipeline_mode<synchronous>, transform_indices = @transform_3, window_bounds = array<i64: 32, 1>}, {pipeline_mode = #tpu.pipeline_mode<synchronous>, transform_indices = @transform_4, window_bounds = array<i64: 32, 32>}, {pipeline_mode = #tpu.pipeline_mode<synchronous>, transform_indices = @transform_5, window_bounds = array<i64: 32, 1>}, {pipeline_mode = #tpu.pipeline_mode<synchronous>, transform_indices = @transform_6, window_bounds = array<i64: 171, 32>}, {pipeline_mode = #tpu.pipeline_mode<synchronous>, transform_indices = @transform_7, window_bounds = array<i64: 11, 1>}, {pipeline_mode = #tpu.pipeline_mode<synchronous>, transform_indices = @transform_8, window_bounds = array<i64: 32, 5>}, {pipeline_mode = #tpu.pipeline_mode<synchronous>, transform_indices = @transform_9, window_bounds = array<i64: 5, 32>}, {pipeline_mode = #tpu.pipeline_mode<synchronous>, transform_indices = @transform_10, window_bounds = array<i64: 5, 1>}, {transform_indices = @transform_11, window_bounds = array<i64: 2, 128>}]} {
    %c0 = arith.constant 0 : index
    %c0_0 = arith.constant 0 : index
    %0 = vector.load %arg1[%c0, %c0_0] : memref<1x128xf32, #tpu.memory_space<vmem>>, vector<1x128xf32>
    %c0_1 = arith.constant 0 : index
    %c0_2 = arith.constant 0 : index
    %1 = vector.load %arg2[%c0_1, %c0_2] : memref<16x128xbf16, #tpu.memory_space<vmem>>, vector<16x128xbf16>
    %c0_3 = arith.constant 0 : index
    %c0_4 = arith.constant 0 : index
    %2 = vector.load %arg3[%c0_3, %c0_4] : memref<32x16xbf16, #tpu.memory_space<vmem>>, vector<32x16xbf16>
    %cst = arith.constant dense<0.000000e+00> : vector<32x128xf32>
    %3 = tpu.matmul %2, %1, %cst {dimension_numbers = #tpu.dot_dimension_numbers<[1], [0], [0], [1], [0, 0, 1, 1], [], []>} : vector<32x16xbf16>, vector<16x128xbf16>, vector<32x128xf32> -> vector<32x128xf32>
    %c0_5 = arith.constant 0 : index
    %c0_6 = arith.constant 0 : index
    %4 = vector.load %arg4[%c0_5, %c0_6] : memref<32x1xf32, #tpu.memory_space<vmem>>, vector<32x1xf32>
    %5 = vector.broadcast %4 : vector<32x1xf32> to vector<32x128xf32>
    %6 = arith.addf %3, %5 : vector<32x128xf32>
    %cst_7 = arith.constant 0.000000e+00 : f32
    %7 = vector.broadcast %cst_7 : f32 to vector<32x128xf32>
    %8 = arith.maximumf %6, %7 : vector<32x128xf32>
    %c0_8 = arith.constant 0 : index
    %c0_9 = arith.constant 0 : index
    %9 = vector.load %arg5[%c0_8, %c0_9] : memref<32x32xbf16, #tpu.memory_space<vmem>>, vector<32x32xbf16>
    %10 = arith.truncf %8 : vector<32x128xf32> to vector<32x128xbf16>
    %cst_10 = arith.constant dense<0.000000e+00> : vector<32x128xf32>
    %11 = tpu.matmul %9, %10, %cst_10 {dimension_numbers = #tpu.dot_dimension_numbers<[1], [0], [0], [1], [0, 0, 1, 1], [], []>} : vector<32x32xbf16>, vector<32x128xbf16>, vector<32x128xf32> -> vector<32x128xf32>
    %c0_11 = arith.constant 0 : index
    %c0_12 = arith.constant 0 : index
    %12 = vector.load %arg6[%c0_11, %c0_12] : memref<32x1xf32, #tpu.memory_space<vmem>>, vector<32x1xf32>
    %13 = vector.broadcast %12 : vector<32x1xf32> to vector<32x128xf32>
    %14 = arith.addf %11, %13 : vector<32x128xf32>
    %cst_13 = arith.constant 0.000000e+00 : f32
    %15 = vector.broadcast %cst_13 : f32 to vector<32x128xf32>
    %16 = arith.maximumf %14, %15 : vector<32x128xf32>
    %17 = arith.truncf %16 : vector<32x128xf32> to vector<32x128xbf16>
    %c0_14 = arith.constant 0 : index
    %c0_15 = arith.constant 0 : index
    %18 = vector.load %arg7[%c0_14, %c0_15] : memref<171x32xbf16, #tpu.memory_space<vmem>>, vector<171x32xbf16>
    %cst_16 = arith.constant dense<0.000000e+00> : vector<171x128xf32>
    %19 = tpu.matmul %18, %17, %cst_16 {dimension_numbers = #tpu.dot_dimension_numbers<[1], [0], [0], [1], [0, 0, 1, 1], [], []>} : vector<171x32xbf16>, vector<32x128xbf16>, vector<171x128xf32> -> vector<171x128xf32>
    %20 = vector.extract_strided_slice %19 {offsets = [160, 0], sizes = [11, 128], strides = [1, 1]} : vector<171x128xf32> to vector<11x128xf32>
    %c0_17 = arith.constant 0 : index
    %c0_18 = arith.constant 0 : index
    %21 = vector.load %arg8[%c0_17, %c0_18] : memref<11x1xf32, #tpu.memory_space<vmem>>, vector<11x1xf32>
    %22 = vector.broadcast %21 : vector<11x1xf32> to vector<11x128xf32>
    %23 = arith.addf %20, %22 : vector<11x128xf32>
    %cst_19 = arith.constant dense<0xFF800000> : vector<128xf32>
    %24 = vector.multi_reduction <maximumf>, %23, %cst_19 [0] : vector<11x128xf32> to vector<128xf32>
    %25 = vector.shape_cast %24 : vector<128xf32> to vector<1x128xf32>
    %26 = vector.broadcast %25 : vector<1x128xf32> to vector<11x128xf32>
    %27 = arith.subf %23, %26 : vector<11x128xf32>
    %28 = math.exp %27 : vector<11x128xf32>
    %cst_20 = arith.constant dense<0.000000e+00> : vector<128xf32>
    %29 = vector.multi_reduction <add>, %28, %cst_20 [0] : vector<11x128xf32> to vector<128xf32>
    %30 = vector.shape_cast %29 : vector<128xf32> to vector<1x128xf32>
    %31 = tpu.reciprocal %30 {approx = true} : vector<1x128xf32> -> vector<1x128xf32>
    %32 = arith.mulf %30, %31 : vector<1x128xf32>
    %cst_21 = arith.constant 2.000000e+00 : f32
    %33 = vector.broadcast %cst_21 : f32 to vector<1x128xf32>
    %34 = arith.subf %33, %32 : vector<1x128xf32>
    %35 = arith.mulf %31, %34 : vector<1x128xf32>
    %36 = vector.broadcast %35 : vector<1x128xf32> to vector<11x128xf32>
    %37 = arith.mulf %28, %36 : vector<11x128xf32>
    %cst_22 = arith.constant 1.000000e+01 : f32
    %38 = vector.broadcast %cst_22 : f32 to vector<1x128xf32>
    %39 = arith.mulf %0, %38 : vector<1x128xf32>
    %40 = math.ceil %39 : vector<1x128xf32>
    %41 = arith.subf %40, %39 : vector<1x128xf32>
    %cst_23 = arith.constant 1.000000e+00 : f32
    %42 = vector.broadcast %cst_23 : f32 to vector<1x128xf32>
    %43 = arith.subf %42, %41 : vector<1x128xf32>
    %44 = arith.fptosi %40 : vector<1x128xf32> to vector<1x128xi32>
    %c0_i32 = arith.constant 0 : i32
    %c10_i32 = arith.constant 10 : i32
    %45 = vector.broadcast %c0_i32 : i32 to vector<1x128xi32>
    %46 = arith.maxsi %45, %44 : vector<1x128xi32>
    %47 = vector.broadcast %c10_i32 : i32 to vector<1x128xi32>
    %48 = arith.minsi %47, %46 : vector<1x128xi32>
    %c1_i32 = arith.constant 1 : i32
    %49 = vector.broadcast %c1_i32 : i32 to vector<1x128xi32>
    %50 = arith.subi %48, %49 : vector<1x128xi32>
    %c0_i32_24 = arith.constant 0 : i32
    %51 = vector.broadcast %c0_i32_24 : i32 to vector<1x128xi32>
    %52 = arith.maxsi %50, %51 : vector<1x128xi32>
    %53 = tpu.iota {dimensions = array<i32: 0>} : vector<11x128xi32>
    %54 = vector.broadcast %52 : vector<1x128xi32> to vector<11x128xi32>
    %55 = arith.cmpi eq, %53, %54 : vector<11x128xi32>
    %cst_25 = arith.constant 1.000000e+00 : f32
    %56 = vector.broadcast %cst_25 : f32 to vector<1x128xf32>
    %57 = arith.subf %56, %43 : vector<1x128xf32>
    %cst_26 = arith.constant 0.000000e+00 : f32
    %58 = vector.shape_cast %57 : vector<1x128xf32> to vector<1x128xf32>
    %59 = vector.broadcast %58 : vector<1x128xf32> to vector<11x128xf32>
    %60 = vector.broadcast %cst_26 : f32 to vector<11x128xf32>
    %61 = arith.select %55, %59, %60 : vector<11x128xi1>, vector<11x128xf32>
    %62 = vector.broadcast %48 : vector<1x128xi32> to vector<11x128xi32>
    %63 = arith.cmpi eq, %53, %62 : vector<11x128xi32>
    %cst_27 = arith.constant 0.000000e+00 : f32
    %64 = vector.shape_cast %43 : vector<1x128xf32> to vector<1x128xf32>
    %65 = vector.broadcast %64 : vector<1x128xf32> to vector<11x128xf32>
    %66 = vector.broadcast %cst_27 : f32 to vector<11x128xf32>
    %67 = arith.select %63, %65, %66 : vector<11x128xi1>, vector<11x128xf32>
    %68 = arith.addf %61, %67 : vector<11x128xf32>
    %69 = arith.mulf %37, %68 : vector<11x128xf32>
    %cst_28 = arith.constant dense<0.000000e+00> : vector<128xf32>
    %70 = vector.multi_reduction <add>, %69, %cst_28 [0] : vector<11x128xf32> to vector<128xf32>
    %71 = vector.shape_cast %70 : vector<128xf32> to vector<1x128xf32>
    %72 = tpu.iota {dimensions = array<i32: 0>} : vector<5x128xi32>
    %73 = vector.shape_cast %0 : vector<1x128xf32> to vector<1x128xf32>
    %74 = vector.broadcast %73 : vector<1x128xf32> to vector<5x128xf32>
    %cst_29 = arith.constant 1.000000e+00 : f32
    %75 = vector.broadcast %cst_29 : f32 to vector<5x128xf32>
    %c1_i32_30 = arith.constant 1 : i32
    %76 = vector.broadcast %c1_i32_30 : i32 to vector<5x128xi32>
    %77 = arith.cmpi eq, %72, %76 : vector<5x128xi32>
    %78 = arith.select %77, %74, %75 : vector<5x128xi1>, vector<5x128xf32>
    %c2_i32 = arith.constant 2 : i32
    %79 = vector.broadcast %c2_i32 : i32 to vector<5x128xi32>
    %80 = arith.cmpi eq, %72, %79 : vector<5x128xi32>
    %81 = arith.mulf %74, %74 : vector<5x128xf32>
    %82 = arith.select %80, %81, %78 : vector<5x128xi1>, vector<5x128xf32>
    %c3_i32 = arith.constant 3 : i32
    %83 = vector.broadcast %c3_i32 : i32 to vector<5x128xi32>
    %84 = arith.cmpi eq, %72, %83 : vector<5x128xi32>
    %cst_31 = arith.constant 0.333333343 : f32
    %85 = vector.broadcast %cst_31 : f32 to vector<5x128xf32>
    %86 = arith.subf %74, %85 : vector<5x128xf32>
    %cst_32 = arith.constant 0.000000e+00 : f32
    %87 = vector.broadcast %cst_32 : f32 to vector<5x128xf32>
    %88 = arith.maximumf %86, %87 : vector<5x128xf32>
    %89 = arith.mulf %88, %88 : vector<5x128xf32>
    %90 = arith.select %84, %89, %82 : vector<5x128xi1>, vector<5x128xf32>
    %c4_i32 = arith.constant 4 : i32
    %91 = vector.broadcast %c4_i32 : i32 to vector<5x128xi32>
    %92 = arith.cmpi eq, %72, %91 : vector<5x128xi32>
    %cst_33 = arith.constant 0.666666686 : f32
    %93 = vector.broadcast %cst_33 : f32 to vector<5x128xf32>
    %94 = arith.subf %74, %93 : vector<5x128xf32>
    %cst_34 = arith.constant 0.000000e+00 : f32
    %95 = vector.broadcast %cst_34 : f32 to vector<5x128xf32>
    %96 = arith.maximumf %94, %95 : vector<5x128xf32>
    %97 = arith.mulf %96, %96 : vector<5x128xf32>
    %98 = arith.select %92, %97, %90 : vector<5x128xi1>, vector<5x128xf32>
    %c0_35 = arith.constant 0 : index
    %c0_36 = arith.constant 0 : index
    %99 = vector.load %arg9[%c0_35, %c0_36] : memref<32x5xf32, #tpu.memory_space<vmem>>, vector<32x5xf32>
    %100 = vector.extract_strided_slice %98 {offsets = [0, 0], sizes = [1, 128], strides = [1, 1]} : vector<5x128xf32> to vector<1x128xf32>
    %101 = vector.extract_strided_slice %19 {offsets = [0, 0], sizes = [32, 128], strides = [1, 1]} : vector<171x128xf32> to vector<32x128xf32>
    %102 = vector.extract_strided_slice %99 {offsets = [0, 0], sizes = [32, 1], strides = [1, 1]} : vector<32x5xf32> to vector<32x1xf32>
    %103 = vector.broadcast %102 : vector<32x1xf32> to vector<32x128xf32>
    %104 = arith.addf %101, %103 : vector<32x128xf32>
    %105 = vector.broadcast %100 : vector<1x128xf32> to vector<32x128xf32>
    %106 = arith.mulf %105, %104 : vector<32x128xf32>
    %107 = vector.extract_strided_slice %98 {offsets = [1, 0], sizes = [1, 128], strides = [1, 1]} : vector<5x128xf32> to vector<1x128xf32>
    %108 = vector.extract_strided_slice %19 {offsets = [32, 0], sizes = [32, 128], strides = [1, 1]} : vector<171x128xf32> to vector<32x128xf32>
    %109 = vector.extract_strided_slice %99 {offsets = [0, 1], sizes = [32, 1], strides = [1, 1]} : vector<32x5xf32> to vector<32x1xf32>
    %110 = vector.broadcast %109 : vector<32x1xf32> to vector<32x128xf32>
    %111 = arith.addf %108, %110 : vector<32x128xf32>
    %112 = vector.broadcast %107 : vector<1x128xf32> to vector<32x128xf32>
    %113 = arith.mulf %112, %111 : vector<32x128xf32>
    %114 = arith.addf %106, %113 : vector<32x128xf32>
    %115 = vector.extract_strided_slice %98 {offsets = [2, 0], sizes = [1, 128], strides = [1, 1]} : vector<5x128xf32> to vector<1x128xf32>
    %116 = vector.extract_strided_slice %19 {offsets = [64, 0], sizes = [32, 128], strides = [1, 1]} : vector<171x128xf32> to vector<32x128xf32>
    %117 = vector.extract_strided_slice %99 {offsets = [0, 2], sizes = [32, 1], strides = [1, 1]} : vector<32x5xf32> to vector<32x1xf32>
    %118 = vector.broadcast %117 : vector<32x1xf32> to vector<32x128xf32>
    %119 = arith.addf %116, %118 : vector<32x128xf32>
    %120 = vector.broadcast %115 : vector<1x128xf32> to vector<32x128xf32>
    %121 = arith.mulf %120, %119 : vector<32x128xf32>
    %122 = arith.addf %114, %121 : vector<32x128xf32>
    %123 = vector.extract_strided_slice %98 {offsets = [3, 0], sizes = [1, 128], strides = [1, 1]} : vector<5x128xf32> to vector<1x128xf32>
    %124 = vector.extract_strided_slice %19 {offsets = [96, 0], sizes = [32, 128], strides = [1, 1]} : vector<171x128xf32> to vector<32x128xf32>
    %125 = vector.extract_strided_slice %99 {offsets = [0, 3], sizes = [32, 1], strides = [1, 1]} : vector<32x5xf32> to vector<32x1xf32>
    %126 = vector.broadcast %125 : vector<32x1xf32> to vector<32x128xf32>
    %127 = arith.addf %124, %126 : vector<32x128xf32>
    %128 = vector.broadcast %123 : vector<1x128xf32> to vector<32x128xf32>
    %129 = arith.mulf %128, %127 : vector<32x128xf32>
    %130 = arith.addf %122, %129 : vector<32x128xf32>
    %131 = vector.extract_strided_slice %98 {offsets = [4, 0], sizes = [1, 128], strides = [1, 1]} : vector<5x128xf32> to vector<1x128xf32>
    %132 = vector.extract_strided_slice %19 {offsets = [128, 0], sizes = [32, 128], strides = [1, 1]} : vector<171x128xf32> to vector<32x128xf32>
    %133 = vector.extract_strided_slice %99 {offsets = [0, 4], sizes = [32, 1], strides = [1, 1]} : vector<32x5xf32> to vector<32x1xf32>
    %134 = vector.broadcast %133 : vector<32x1xf32> to vector<32x128xf32>
    %135 = arith.addf %132, %134 : vector<32x128xf32>
    %136 = vector.broadcast %131 : vector<1x128xf32> to vector<32x128xf32>
    %137 = arith.mulf %136, %135 : vector<32x128xf32>
    %138 = arith.addf %130, %137 : vector<32x128xf32>
    %cst_37 = arith.constant 0.000000e+00 : f32
    %139 = vector.broadcast %cst_37 : f32 to vector<32x128xf32>
    %140 = arith.maximumf %138, %139 : vector<32x128xf32>
    %c0_38 = arith.constant 0 : index
    %c0_39 = arith.constant 0 : index
    %141 = vector.load %arg10[%c0_38, %c0_39] : memref<5x32xbf16, #tpu.memory_space<vmem>>, vector<5x32xbf16>
    %142 = arith.truncf %140 : vector<32x128xf32> to vector<32x128xbf16>
    %cst_40 = arith.constant dense<0.000000e+00> : vector<5x128xf32>
    %143 = tpu.matmul %141, %142, %cst_40 {dimension_numbers = #tpu.dot_dimension_numbers<[1], [0], [0], [1], [0, 0, 1, 1], [], []>} : vector<5x32xbf16>, vector<32x128xbf16>, vector<5x128xf32> -> vector<5x128xf32>
    %c0_41 = arith.constant 0 : index
    %c0_42 = arith.constant 0 : index
    %144 = vector.load %arg11[%c0_41, %c0_42] : memref<5x1xf32, #tpu.memory_space<vmem>>, vector<5x1xf32>
    %145 = vector.broadcast %144 : vector<5x1xf32> to vector<5x128xf32>
    %146 = arith.addf %143, %145 : vector<5x128xf32>
    %147 = arith.mulf %98, %146 : vector<5x128xf32>
    %cst_43 = arith.constant dense<0.000000e+00> : vector<128xf32>
    %148 = vector.multi_reduction <add>, %147, %cst_43 [0] : vector<5x128xf32> to vector<128xf32>
    %149 = vector.shape_cast %148 : vector<128xf32> to vector<1x128xf32>
    %c0_44 = arith.constant 0 : index
    %c0_45 = arith.constant 0 : index
    %150 = vector.load %arg12[%c0_44, %c0_45] : memref<2x128xf32, #tpu.memory_space<vmem>>, vector<1x128xf32>
    tpu.vector_store %arg12[%c0_44, %c0_45], %71 {strides = array<i32>} : memref<2x128xf32, #tpu.memory_space<vmem>>, vector<1x128xf32>,
    %c1 = arith.constant 1 : index
    %c0_46 = arith.constant 0 : index
    %151 = vector.load %arg12[%c1, %c0_46] : memref<2x128xf32, #tpu.memory_space<vmem>>, vector<1x128xf32>
    tpu.vector_store %arg12[%c1, %c0_46], %149 {strides = array<i32>} : memref<2x128xf32, #tpu.memory_space<vmem>>, vector<1x128xf32>,
    return
  }
  func.func @transform_0(%arg0: i32) -> (i32, i32) {
    %c0_i32 = arith.constant 0 : i32
    %c0_i32_0 = arith.constant 0 : i32
    return %c0_i32, %arg0 : i32, i32
  }
  func.func @transform_1(%arg0: i32) -> (i32, i32) {
    %c0_i32 = arith.constant 0 : i32
    %c0_i32_0 = arith.constant 0 : i32
    return %c0_i32, %arg0 : i32, i32
  }
  func.func @transform_2(%arg0: i32) -> (i32, i32) {
    %c0_i32 = arith.constant 0 : i32
    %c0_i32_0 = arith.constant 0 : i32
    %c0_i32_1 = arith.constant 0 : i32
    return %c0_i32, %c0_i32_0 : i32, i32
  }
  func.func @transform_3(%arg0: i32) -> (i32, i32) {
    %c0_i32 = arith.constant 0 : i32
    %c0_i32_0 = arith.constant 0 : i32
    %c0_i32_1 = arith.constant 0 : i32
    return %c0_i32, %c0_i32_0 : i32, i32
  }
  func.func @transform_4(%arg0: i32) -> (i32, i32) {
    %c0_i32 = arith.constant 0 : i32
    %c0_i32_0 = arith.constant 0 : i32
    %c0_i32_1 = arith.constant 0 : i32
    return %c0_i32, %c0_i32_0 : i32, i32
  }
  func.func @transform_5(%arg0: i32) -> (i32, i32) {
    %c0_i32 = arith.constant 0 : i32
    %c0_i32_0 = arith.constant 0 : i32
    %c0_i32_1 = arith.constant 0 : i32
    return %c0_i32, %c0_i32_0 : i32, i32
  }
  func.func @transform_6(%arg0: i32) -> (i32, i32) {
    %c0_i32 = arith.constant 0 : i32
    %c0_i32_0 = arith.constant 0 : i32
    %c0_i32_1 = arith.constant 0 : i32
    return %c0_i32, %c0_i32_0 : i32, i32
  }
  func.func @transform_7(%arg0: i32) -> (i32, i32) {
    %c0_i32 = arith.constant 0 : i32
    %c0_i32_0 = arith.constant 0 : i32
    %c0_i32_1 = arith.constant 0 : i32
    return %c0_i32, %c0_i32_0 : i32, i32
  }
  func.func @transform_8(%arg0: i32) -> (i32, i32) {
    %c0_i32 = arith.constant 0 : i32
    %c0_i32_0 = arith.constant 0 : i32
    %c0_i32_1 = arith.constant 0 : i32
    return %c0_i32, %c0_i32_0 : i32, i32
  }
  func.func @transform_9(%arg0: i32) -> (i32, i32) {
    %c0_i32 = arith.constant 0 : i32
    %c0_i32_0 = arith.constant 0 : i32
    %c0_i32_1 = arith.constant 0 : i32
    return %c0_i32, %c0_i32_0 : i32, i32
  }
  func.func @transform_10(%arg0: i32) -> (i32, i32) {
    %c0_i32 = arith.constant 0 : i32
    %c0_i32_0 = arith.constant 0 : i32
    %c0_i32_1 = arith.constant 0 : i32
    return %c0_i32, %c0_i32_0 : i32, i32
  }
  func.func @transform_11(%arg0: i32) -> (i32, i32) {
    %c0_i32 = arith.constant 0 : i32
    %c0_i32_0 = arith.constant 0 : i32
    return %c0_i32, %arg0 : i32, i32
  }
}

</mosaic_0001>

<llo_original>
// kernel: vcnet_forward.1
$region0: #{vcnet_forward.1}
  #allocation0 [shape = 'u32[]', space=smem, size = 0x4, offset = 0x4, fixed_abs, tag = 'smem constant byte address 0x4 - core index']
  #allocation1 [shape = 'u32[144,128]{1,0:T(1,128)}', space=vmem, size = 0x12000, scoped, tag = 'internal scratch']
  %s0 = inlined_call_operand.vmem [shape: f32[1,128], index: 0, kind: input, shape index: {}]
  %s1 = inlined_call_operand.vmem [shape: bf16[16,128], index: 1, kind: input, shape index: {}]
  %s2 = inlined_call_operand.vmem [shape: bf16[32,16], index: 2, kind: input, shape index: {}]
  %s3 = inlined_call_operand.vmem [shape: f32[32,1], index: 3, kind: input, shape index: {}]
  %s4 = inlined_call_operand.vmem [shape: bf16[32,32], index: 4, kind: input, shape index: {}]
  %s5 = inlined_call_operand.vmem [shape: f32[32,1], index: 5, kind: input, shape index: {}]
  %s6 = inlined_call_operand.vmem [shape: bf16[171,32], index: 6, kind: input, shape index: {}]
  %s7 = inlined_call_operand.vmem [shape: f32[11,1], index: 7, kind: input, shape index: {}]
  %s8 = inlined_call_operand.vmem [shape: f32[32,5], index: 8, kind: input, shape index: {}]
  %s9 = inlined_call_operand.vmem [shape: bf16[5,32], index: 9, kind: input, shape index: {}]
  %s10 = inlined_call_operand.vmem [shape: f32[5,1], index: 10, kind: input, shape index: {}]
  %s11 = inlined_call_operand.vmem [shape: f32[2,128], index: 11, kind: output, shape index: {}]
  %s12 = sld [smem:[#allocation0]]
  $region54: #{vcnet_forward.1} parent=0
    _
  %s14 = ssub.s32 1, %s12
  %s15 = scalar_select 0, %s14, %s12
  // Predicated region
  $region2: #{vcnet_forward.1} parent=0 // pred_check
    _
  $region3: #{vcnet_forward.1} parent=0 // pred_check_branch
    %17 = sbr.rel (0) target = $region5
  $region4: #{vcnet_forward.1} parent=0 // pred_region
    _
  $region5: #{vcnet_forward.1} parent=0 // pred_fallthru
    _
  // Predicated region
  $region6: #{vcnet_forward.1} parent=0 // pred_check
    _
  $region7: #{vcnet_forward.1} parent=0 // pred_check_branch
    %19 = sbr.rel (0) target = $region9
  $region8: #{vcnet_forward.1} parent=0 // pred_region
    _
  $region9: #{vcnet_forward.1} parent=0 // pred_fallthru
    _
  // Predicated region
  $region10: #{vcnet_forward.1} parent=0 // pred_check
    _
  $region11: #{vcnet_forward.1} parent=0 // pred_check_branch
    %21 = sbr.rel (0) target = $region13
  $region12: #{vcnet_forward.1} parent=0 // pred_region
    _
  $region13: #{vcnet_forward.1} parent=0 // pred_fallthru
    _
  // Predicated region
  $region14: #{vcnet_forward.1} parent=0 // pred_check
    _
  $region15: #{vcnet_forward.1} parent=0 // pred_check_branch
    %23 = sbr.rel (0) target = $region17
  $region16: #{vcnet_forward.1} parent=0 // pred_region
    _
  $region17: #{vcnet_forward.1} parent=0 // pred_fallthru
    _
  // Predicated region
  $region18: #{vcnet_forward.1} parent=0 // pred_check
    _
  $region19: #{vcnet_forward.1} parent=0 // pred_check_branch
    %25 = sbr.rel (0) target = $region21
  $region20: #{vcnet_forward.1} parent=0 // pred_region
    _
  $region21: #{vcnet_forward.1} parent=0 // pred_fallthru
    _
  // Predicated region
  $region22: #{vcnet_forward.1} parent=0 // pred_check
    _
  $region23: #{vcnet_forward.1} parent=0 // pred_check_branch
    %27 = sbr.rel (0) target = $region25
  $region24: #{vcnet_forward.1} parent=0 // pred_region
    _
  $region25: #{vcnet_forward.1} parent=0 // pred_fallthru
    _
  // Predicated region
  $region26: #{vcnet_forward.1} parent=0 // pred_check
    _
  $region27: #{vcnet_forward.1} parent=0 // pred_check_branch
    %29 = sbr.rel (0) target = $region29
  $region28: #{vcnet_forward.1} parent=0 // pred_region
    _
  $region29: #{vcnet_forward.1} parent=0 // pred_fallthru
    _
  // Predicated region
  $region30: #{vcnet_forward.1} parent=0 // pred_check
    _
  $region31: #{vcnet_forward.1} parent=0 // pred_check_branch
    %31 = sbr.rel (0) target = $region33
  $region32: #{vcnet_forward.1} parent=0 // pred_region
    _
  $region33: #{vcnet_forward.1} parent=0 // pred_fallthru
    _
  // Predicated region
  $region34: #{vcnet_forward.1} parent=0 // pred_check
    _
  $region35: #{vcnet_forward.1} parent=0 // pred_check_branch
    %33 = sbr.rel (0) target = $region37
  $region36: #{vcnet_forward.1} parent=0 // pred_region
    _
  $region37: #{vcnet_forward.1} parent=0 // pred_fallthru
    _
  // Predicated region
  $region38: #{vcnet_forward.1} parent=0 // pred_check
    _
  $region39: #{vcnet_forward.1} parent=0 // pred_check_branch
    %35 = sbr.rel (0) target = $region41
  $region40: #{vcnet_forward.1} parent=0 // pred_region
    _
  $region41: #{vcnet_forward.1} parent=0 // pred_fallthru
    _
  // Predicated region
  $region42: #{vcnet_forward.1} parent=0 // pred_check
    _
  $region43: #{vcnet_forward.1} parent=0 // pred_check_branch
    %37 = sbr.rel (0) target = $region45
  $region44: #{vcnet_forward.1} parent=0 // pred_region
    _
  $region45: #{vcnet_forward.1} parent=0 // pred_fallthru
    _
  %v39 = vld [vmem:[%s0] sm:$0x1]
  %v40 = vld [vmem:[%s1] sm:$0xf]
  %v41 = vld [vmem:[%s1 + $0x4] sm:$0xf]
  %v42 = vld [vmem:[%s2] sm:$0xf]
  %v43 = vld [vmem:[%s2 + $0x4] sm:$0xf]
  %v44 = vld [vmem:[%s2 + $0x8] sm:$0xf]
  %v45 = vld [vmem:[%s2 + $0xc] sm:$0xf]
  %v46 = vld [vmem:[%s3] sm:$0xff]
  %v47 = vld [vmem:[%s3 + $0x8] sm:$0xff]
  %v48 = vld [vmem:[%s3 + $0x10] sm:$0xff]
  %v49 = vld [vmem:[%s3 + $0x18] sm:$0xff]
  %51 = vset.pattern.permute.xlu0 0
  %52 = vperm.xlu0 %51, %v46
  %v53 = vpop.permute.xlu0 %52
  %56 = vset.pattern.permute.xlu0 0
  %57 = vperm.xlu0 %56, %v47
  %v58 = vpop.permute.xlu0 %57
  %61 = vset.pattern.permute.xlu0 0
  %62 = vperm.xlu0 %61, %v48
  %v63 = vpop.permute.xlu0 %62
  %66 = vset.pattern.permute.xlu0 0
  %67 = vperm.xlu0 %66, %v49
  %v68 = vpop.permute.xlu0 %67
  %v74 = vunpack.c.l.b16 %v42
  %v75 = vunpack.c.l.b16 %v43
  %v76 = vunpack.c.l.b16 %v44
  %v77 = vunpack.c.l.b16 %v45
  %v78 = vpack.c.b16 %v75, %v74
  %v79 = vpack.c.b16 %v77, %v76
  %v82 = vunpack.c.l.b16 %v40
  %v83 = vunpack.c.l.b16 %v41
  %v84 = vpack.c.b16 %v83, %v82
  %vm86 = vcmask 130048
  %v88 = vsel %vm86, %v78, 0
  %v91 = vsel %vm86, %v79, 0
  %93 = vmatprep.subr.bf16.mxu0 0
  %94 = vmatpush1.bf16.msra.mxu0 %v84
  %95 = vmatprep.subr.bf16.mxu0 0
  %96 = vmatpush1.bf16.msra.mxu0 0
  %97 = vmatprep.subr.bf16.mxu0 0
  %98 = vmatpush1.bf16.msra.mxu0 0
  %99 = vmatprep.subr.bf16.mxu0 0
  %100 = vmatpush1.bf16.msra.mxu0 0
  %101 = vmatprep.subr.bf16.mxu0 0
  %102 = vmatpush1.bf16.msra.mxu0 0
  %103 = vmatprep.subr.bf16.mxu0 0
  %104 = vmatpush1.bf16.msra.mxu0 0
  %105 = vmatprep.subr.bf16.mxu0 0
  %106 = vmatpush1.bf16.msra.mxu0 0
  %107 = vmatprep.subr.bf16.mxu0 0
  %108 = vmatpush1.bf16.msra.mxu0 0
  %109 = vmatprep.subr.bf16.mxu0 0
  %110 = vmatpush1.bf16.msra.mxu0 0
  %111 = vmatprep.subr.bf16.mxu0 0
  %112 = vmatpush1.bf16.msra.mxu0 0
  %113 = vmatprep.subr.bf16.mxu0 0
  %114 = vmatpush1.bf16.msra.mxu0 0
  %115 = vmatprep.subr.bf16.mxu0 0
  %116 = vmatpush1.bf16.msra.mxu0 0
  %117 = vmatprep.subr.bf16.mxu0 0
  %118 = vmatpush1.bf16.msra.mxu0 0
  %119 = vmatprep.subr.bf16.mxu0 0
  %120 = vmatpush1.bf16.msra.mxu0 0
  %121 = vmatprep.subr.bf16.mxu0 0
  %122 = vmatpush1.bf16.msra.mxu0 0
  %123 = vmatprep.subr.bf16.mxu0 0
  %124 = vmatpush1.bf16.msra.mxu0 0
  %125 = vmatprep.mubr.bf16.mxu0 0
  %126 = vmatmul.mubr.bf16.gmra.mrb[0].mxu0 %v88
  %v127 = vpop.f32.mrb[0].mxu0
  %v128 = vadd.f32 %v53, %v127
  %v129 = vpop.f32.mrb[0].mxu0
  %v130 = vpop.f32.mrb[0].mxu0
  %v131 = vadd.f32 %v58, %v130
  %v132 = vpop.f32.mrb[0].mxu0
  %133 = vmatprep.mubr.bf16.mxu0 0
  %134 = vmatmul.mubr.bf16.gmra.mrb[0].mxu0 %v91
  %v135 = vpop.f32.mrb[0].mxu0
  %v136 = vadd.f32 %v63, %v135
  %v137 = vpop.f32.mrb[0].mxu0
  %v138 = vpop.f32.mrb[0].mxu0
  %v139 = vadd.f32 %v68, %v138
  %v140 = vpop.f32.mrb[0].mxu0
  %141 = vdwg.mxu0
  %v142 = vmax.f32 %v128, 0.0
  %v143 = vmax.f32 %v131, 0.0
  %v144 = vmax.f32 %v136, 0.0
  %v145 = vmax.f32 %v139, 0.0
  %v146 = vld [vmem:[%s4] sm:$0xf]
  %v147 = vld [vmem:[%s4 + $0x4] sm:$0xf]
  %v148 = vld [vmem:[%s4 + $0x8] sm:$0xf]
  %v149 = vld [vmem:[%s4 + $0xc] sm:$0xf]
  %v150 = vpack.c.bf16 %v143, %v142
  %v151 = vpack.c.bf16 %v145, %v144
  %v152 = vld [vmem:[%s5] sm:$0xff]
  %v153 = vld [vmem:[%s5 + $0x8] sm:$0xff]
  %v154 = vld [vmem:[%s5 + $0x10] sm:$0xff]
  %v155 = vld [vmem:[%s5 + $0x18] sm:$0xff]
  %157 = vset.pattern.permute.xlu0 0
  %158 = vperm.xlu0 %157, %v152
  %v159 = vpop.permute.xlu0 %158
  %162 = vset.pattern.permute.xlu0 0
  %163 = vperm.xlu0 %162, %v153
  %v164 = vpop.permute.xlu0 %163
  %167 = vset.pattern.permute.xlu0 0
  %168 = vperm.xlu0 %167, %v154
  %v169 = vpop.permute.xlu0 %168
  %172 = vset.pattern.permute.xlu0 0
  %173 = vperm.xlu0 %172, %v155
  %v174 = vpop.permute.xlu0 %173
  %v180 = vunpack.c.l.b16 %v146
  %v181 = vunpack.c.l.b16 %v147
  %v182 = vunpack.c.l.b16 %v148
  %v183 = vunpack.c.l.b16 %v149
  %v184 = vpack.c.b16 %v181, %v180
  %v185 = vpack.c.b16 %v183, %v182
  %vm186 = vcmask 261120
  %v188 = vsel %vm186, %v184, 0
  %v191 = vsel %vm186, %v185, 0
  %193 = vmatprep.subr.bf16.mxu0 0
  %194 = vmatpush1.bf16.msra.mxu0 %v150
  %195 = vmatprep.subr.bf16.mxu0 0
  %196 = vmatpush1.bf16.msra.mxu0 %v151
  %197 = vmatprep.subr.bf16.mxu0 0
  %198 = vmatpush1.bf16.msra.mxu0 0
  %199 = vmatprep.subr.bf16.mxu0 0
  %200 = vmatpush1.bf16.msra.mxu0 0
  %201 = vmatprep.subr.bf16.mxu0 0
  %202 = vmatpush1.bf16.msra.mxu0 0
  %203 = vmatprep.subr.bf16.mxu0 0
  %204 = vmatpush1.bf16.msra.mxu0 0
  %205 = vmatprep.subr.bf16.mxu0 0
  %206 = vmatpush1.bf16.msra.mxu0 0
  %207 = vmatprep.subr.bf16.mxu0 0
  %208 = vmatpush1.bf16.msra.mxu0 0
  %209 = vmatprep.subr.bf16.mxu0 0
  %210 = vmatpush1.bf16.msra.mxu0 0
  %211 = vmatprep.subr.bf16.mxu0 0
  %212 = vmatpush1.bf16.msra.mxu0 0
  %213 = vmatprep.subr.bf16.mxu0 0
  %214 = vmatpush1.bf16.msra.mxu0 0
  %215 = vmatprep.subr.bf16.mxu0 0
  %216 = vmatpush1.bf16.msra.mxu0 0
  %217 = vmatprep.subr.bf16.mxu0 0
  %218 = vmatpush1.bf16.msra.mxu0 0
  %219 = vmatprep.subr.bf16.mxu0 0
  %220 = vmatpush1.bf16.msra.mxu0 0
  %221 = vmatprep.subr.bf16.mxu0 0
  %222 = vmatpush1.bf16.msra.mxu0 0
  %223 = vmatprep.subr.bf16.mxu0 0
  %224 = vmatpush1.bf16.msra.mxu0 0
  %225 = vmatprep.mubr.bf16.mxu0 0
  %226 = vmatmul.mubr.bf16.gmra.mrb[0].mxu0 %v188
  %v227 = vpop.f32.mrb[0].mxu0
  %v228 = vadd.f32 %v159, %v227
  %v229 = vpop.f32.mrb[0].mxu0
  %v230 = vpop.f32.mrb[0].mxu0
  %v231 = vadd.f32 %v164, %v230
  %v232 = vpop.f32.mrb[0].mxu0
  %233 = vmatprep.mubr.bf16.mxu0 0
  %234 = vmatmul.mubr.bf16.gmra.mrb[0].mxu0 %v191
  %v235 = vpop.f32.mrb[0].mxu0
  %v236 = vadd.f32 %v169, %v235
  %v237 = vpop.f32.mrb[0].mxu0
  %v238 = vpop.f32.mrb[0].mxu0
  %v239 = vadd.f32 %v174, %v238
  %v240 = vpop.f32.mrb[0].mxu0
  %241 = vdwg.mxu0
  %v242 = vmax.f32 %v228, 0.0
  %v243 = vmax.f32 %v231, 0.0
  %v244 = vmax.f32 %v236, 0.0
  %v245 = vmax.f32 %v239, 0.0
  %v246 = vpack.c.bf16 %v243, %v242
  %v247 = vpack.c.bf16 %v245, %v244
  %v248 = vld [vmem:[%s6] sm:$0xf]
  %v249 = vld [vmem:[%s6 + $0x4] sm:$0xf]
  %v250 = vld [vmem:[%s6 + $0x8] sm:$0xf]
  %v251 = vld [vmem:[%s6 + $0xc] sm:$0xf]
  %v252 = vld [vmem:[%s6 + $0x10] sm:$0xf]
  %v253 = vld [vmem:[%s6 + $0x14] sm:$0xf]
  %v254 = vld [vmem:[%s6 + $0x18] sm:$0xf]
  %v255 = vld [vmem:[%s6 + $0x1c] sm:$0xf]
  %v256 = vld [vmem:[%s6 + $0x20] sm:$0xf]
  %v257 = vld [vmem:[%s6 + $0x24] sm:$0xf]
  %v258 = vld [vmem:[%s6 + $0x28] sm:$0xf]
  %v259 = vld [vmem:[%s6 + $0x2c] sm:$0xf]
  %v260 = vld [vmem:[%s6 + $0x30] sm:$0xf]
  %v261 = vld [vmem:[%s6 + $0x34] sm:$0xf]
  %v262 = vld [vmem:[%s6 + $0x38] sm:$0xf]
  %v263 = vld [vmem:[%s6 + $0x3c] sm:$0xf]
  %v264 = vld [vmem:[%s6 + $0x40] sm:$0xf]
  %v265 = vld [vmem:[%s6 + $0x44] sm:$0xf]
  %v266 = vld [vmem:[%s6 + $0x48] sm:$0xf]
  %v267 = vld [vmem:[%s6 + $0x4c] sm:$0xf]
  %v268 = vld [vmem:[%s6 + $0x50] sm:$0xf]
  %v269 = vld [vmem:[%s6 + $0x54] sm:$0x3]
  %v292 = vunpack.c.l.b16 %v248
  %v293 = vunpack.c.l.b16 %v249
  %v294 = vunpack.c.l.b16 %v250
  %v295 = vunpack.c.l.b16 %v251
  %v296 = vunpack.c.l.b16 %v252
  %v297 = vunpack.c.l.b16 %v253
  %v298 = vunpack.c.l.b16 %v254
  %v299 = vunpack.c.l.b16 %v255
  %v300 = vunpack.c.l.b16 %v256
  %v301 = vunpack.c.l.b16 %v257
  %v302 = vunpack.c.l.b16 %v258
  %v303 = vunpack.c.l.b16 %v259
  %v304 = vunpack.c.l.b16 %v260
  %v305 = vunpack.c.l.b16 %v261
  %v306 = vunpack.c.l.b16 %v262
  %v307 = vunpack.c.l.b16 %v263
  %v308 = vunpack.c.l.b16 %v264
  %v309 = vunpack.c.l.b16 %v265
  %v310 = vunpack.c.l.b16 %v266
  %v311 = vunpack.c.l.b16 %v267
  %v312 = vunpack.c.l.b16 %v268
  %v313 = vunpack.c.l.b16 %v269
  %v314 = vpack.c.b16 %v293, %v292
  %v315 = vpack.c.b16 %v295, %v294
  %v316 = vpack.c.b16 %v297, %v296
  %v317 = vpack.c.b16 %v299, %v298
  %v318 = vpack.c.b16 %v301, %v300
  %v319 = vpack.c.b16 %v303, %v302
  %v320 = vpack.c.b16 %v305, %v304
  %v321 = vpack.c.b16 %v307, %v306
  %v322 = vpack.c.b16 %v309, %v308
  %v323 = vpack.c.b16 %v311, %v310
  %v324 = vpack.c.b16 %v313, %v312
  %v326 = vsel %vm186, %v314, 0
  %v329 = vsel %vm186, %v315, 0
  %v332 = vsel %vm186, %v316, 0
  %v335 = vsel %vm186, %v317, 0
  %v338 = vsel %vm186, %v318, 0
  %v341 = vsel %vm186, %v319, 0
  %v344 = vsel %vm186, %v320, 0
  %v347 = vsel %vm186, %v321, 0
  %v350 = vsel %vm186, %v322, 0
  %v353 = vsel %vm186, %v323, 0
  %v356 = vsel %vm186, %v324, 0
  %358 = vmatprep.subr.bf16.mxu0 0
  %359 = vmatpush1.bf16.msra.mxu0 %v246
  %360 = vmatprep.subr.bf16.mxu0 0
  %361 = vmatpush1.bf16.msra.mxu0 %v247
  %362 = vmatprep.subr.bf16.mxu0 0
  %363 = vmatpush1.bf16.msra.mxu0 0
  %364 = vmatprep.subr.bf16.mxu0 0
  %365 = vmatpush1.bf16.msra.mxu0 0
  %366 = vmatprep.subr.bf16.mxu0 0
  %367 = vmatpush1.bf16.msra.mxu0 0
  %368 = vmatprep.subr.bf16.mxu0 0
  %369 = vmatpush1.bf16.msra.mxu0 0
  %370 = vmatprep.subr.bf16.mxu0 0
  %371 = vmatpush1.bf16.msra.mxu0 0
  %372 = vmatprep.subr.bf16.mxu0 0
  %373 = vmatpush1.bf16.msra.mxu0 0
  %374 = vmatprep.subr.bf16.mxu0 0
  %375 = vmatpush1.bf16.msra.mxu0 0
  %376 = vmatprep.subr.bf16.mxu0 0
  %377 = vmatpush1.bf16.msra.mxu0 0
  %378 = vmatprep.subr.bf16.mxu0 0
  %379 = vmatpush1.bf16.msra.mxu0 0
  %380 = vmatprep.subr.bf16.mxu0 0
  %381 = vmatpush1.bf16.msra.mxu0 0
  %382 = vmatprep.subr.bf16.mxu0 0
  %383 = vmatpush1.bf16.msra.mxu0 0
  %384 = vmatprep.subr.bf16.mxu0 0
  %385 = vmatpush1.bf16.msra.mxu0 0
  %386 = vmatprep.subr.bf16.mxu0 0
  %387 = vmatpush1.bf16.msra.mxu0 0
  %388 = vmatprep.subr.bf16.mxu0 0
  %389 = vmatpush1.bf16.msra.mxu0 0
  %390 = vmatprep.mubr.bf16.mxu0 0
  %391 = vmatmul.mubr.bf16.gmra.mrb[0].mxu0 %v326
  %v392 = vpop.f32.mrb[0].mxu0
  %v393 = vadd.f32 0.0, %v392
  %v394 = vpop.f32.mrb[0].mxu0
  %v395 = vpop.f32.mrb[0].mxu0
  %v396 = vadd.f32 0.0, %v395
  %v397 = vpop.f32.mrb[0].mxu0
  %398 = vmatprep.mubr.bf16.mxu0 0
  %399 = vmatmul.mubr.bf16.gmra.mrb[0].mxu0 %v329
  %v400 = vpop.f32.mrb[0].mxu0
  %v401 = vadd.f32 0.0, %v400
  %v402 = vpop.f32.mrb[0].mxu0
  %v403 = vpop.f32.mrb[0].mxu0
  %v404 = vadd.f32 0.0, %v403
  %v405 = vpop.f32.mrb[0].mxu0
  %406 = vmatprep.mubr.bf16.mxu0 0
  %407 = vmatmul.mubr.bf16.gmra.mrb[0].mxu0 %v332
  %v408 = vpop.f32.mrb[0].mxu0
  %v409 = vadd.f32 0.0, %v408
  %v410 = vpop.f32.mrb[0].mxu0
  %v411 = vpop.f32.mrb[0].mxu0
  %v412 = vadd.f32 0.0, %v411
  %v413 = vpop.f32.mrb[0].mxu0
  %414 = vmatprep.mubr.bf16.mxu0 0
  %415 = vmatmul.mubr.bf16.gmra.mrb[0].mxu0 %v335
  %v416 = vpop.f32.mrb[0].mxu0
  %v417 = vadd.f32 0.0, %v416
  %v418 = vpop.f32.mrb[0].mxu0
  %v419 = vpop.f32.mrb[0].mxu0
  %v420 = vadd.f32 0.0, %v419
  %v421 = vpop.f32.mrb[0].mxu0
  %422 = vmatprep.mubr.bf16.mxu0 0
  %423 = vmatmul.mubr.bf16.gmra.mrb[0].mxu0 %v338
  %v424 = vpop.f32.mrb[0].mxu0
  %v425 = vadd.f32 0.0, %v424
  %v426 = vpop.f32.mrb[0].mxu0
  %v427 = vpop.f32.mrb[0].mxu0
  %v428 = vadd.f32 0.0, %v427
  %v429 = vpop.f32.mrb[0].mxu0
  %430 = vmatprep.mubr.bf16.mxu0 0
  %431 = vmatmul.mubr.bf16.gmra.mrb[0].mxu0 %v341
  %v432 = vpop.f32.mrb[0].mxu0
  %v433 = vadd.f32 0.0, %v432
  %v434 = vpop.f32.mrb[0].mxu0
  %v435 = vpop.f32.mrb[0].mxu0
  %v436 = vadd.f32 0.0, %v435
  %v437 = vpop.f32.mrb[0].mxu0
  %438 = vmatprep.mubr.bf16.mxu0 0
  %439 = vmatmul.mubr.bf16.gmra.mrb[0].mxu0 %v344
  %v440 = vpop.f32.mrb[0].mxu0
  %v441 = vadd.f32 0.0, %v440
  %v442 = vpop.f32.mrb[0].mxu0
  %v443 = vpop.f32.mrb[0].mxu0
  %v444 = vadd.f32 0.0, %v443
  %v445 = vpop.f32.mrb[0].mxu0
  %446 = vmatprep.mubr.bf16.mxu0 0
  %447 = vmatmul.mubr.bf16.gmra.mrb[0].mxu0 %v347
  %v448 = vpop.f32.mrb[0].mxu0
  %v449 = vadd.f32 0.0, %v448
  %v450 = vpop.f32.mrb[0].mxu0
  %v451 = vpop.f32.mrb[0].mxu0
  %v452 = vadd.f32 0.0, %v451
  %v453 = vpop.f32.mrb[0].mxu0
  %454 = vmatprep.mubr.bf16.mxu0 0
  %455 = vmatmul.mubr.bf16.gmra.mrb[0].mxu0 %v350
  %v456 = vpop.f32.mrb[0].mxu0
  %v457 = vadd.f32 0.0, %v456
  %v458 = vpop.f32.mrb[0].mxu0
  %v459 = vpop.f32.mrb[0].mxu0
  %v460 = vadd.f32 0.0, %v459
  %v461 = vpop.f32.mrb[0].mxu0
  %462 = vmatprep.mubr.bf16.mxu0 0
  %463 = vmatmul.mubr.bf16.gmra.mrb[0].mxu0 %v353
  %v464 = vpop.f32.mrb[0].mxu0
  %v465 = vadd.f32 0.0, %v464
  %v466 = vpop.f32.mrb[0].mxu0
  %v467 = vpop.f32.mrb[0].mxu0
  %v468 = vadd.f32 0.0, %v467
  %v469 = vpop.f32.mrb[0].mxu0
  %470 = vmatprep.mubr.bf16.mxu0 0
  %471 = vmatmul.mubr.bf16.gmra.mrb[0].mxu0 %v356
  %v472 = vpop.f32.mrb[0].mxu0
  %v473 = vadd.f32 0.0, %v472
  %v474 = vpop.f32.mrb[0].mxu0
  %v475 = vpop.f32.mrb[0].mxu0
  %v476 = vadd.f32 0.0, %v475
  %v477 = vpop.f32.mrb[0].mxu0
  %478 = vdwg.mxu0
  %v479 = vld [vmem:[%s7] sm:$0xff]
  %v480 = vld [vmem:[%s7 + $0x8] sm:$0x7]
  %482 = vset.pattern.permute.xlu0 0
  %483 = vperm.xlu0 %482, %v479
  %v484 = vpop.permute.xlu0 %483
  %487 = vset.pattern.permute.xlu0 0
  %488 = vperm.xlu0 %487, %v480
  %v489 = vpop.permute.xlu0 %488
  %v491 = vadd.f32 %v473, %v484
  %v492 = vadd.f32 %v476, %v489
  %vm493 = vcmask 1042432
  %v494 = vsel %vm493, %v492, -inf
  %v495 = vmax.f32 %v491, %v494
  %v496 = vrot.slane %v495, 4
  %v497 = vmax.f32 %v495, %v496
  %v498 = vrot.slane %v497, 2
  %v499 = vmax.f32 %v497, %v498
  %v500 = vrot.slane %v499, 1
  %v501 = vmax.f32 %v499, %v500
  %v502 = vsub.f32 %v491, %v501
  %v503 = vsub.f32 %v492, %v501
  %v504 = vmul.f32 %v502, 1.442695
  %v505 = vpow.pop %v504
  %v506 = vmul.f32 %v503, 1.442695
  %v507 = vpow.pop %v506
  %v508 = vsel %vm493, %v507, 0.0
  %v509 = vadd.f32 %v505, %v508
  %v510 = vrot.slane %v509, 4
  %v511 = vadd.f32 %v509, %v510
  %v512 = vrot.slane %v511, 2
  %v513 = vadd.f32 %v511, %v512
  %v514 = vrot.slane %v513, 1
  %v515 = vadd.f32 %v513, %v514
  %v516 = vrcp.pop %v515
  %v517 = vmul.f32 %v515, %v516
  %v518 = vsub.f32 2.0, %v517
  %v519 = vmul.f32 %v516, %v518
  %v520 = vmul.f32 %v505, %v519
  %v521 = vmul.f32 %v507, %v519
  %v522 = vmul.f32 %v39, 10.0
  %v523 = vceil.f32 %v522
  %v524 = vsub.f32 %v523, %v522
  %v525 = vsub.f32 1.0, %v524
  %v526 = vcvt.f32.s32.to.zero.pseudo %v523
  %vm527 = vcmp.gt.s32.totalorder %v526, 0
  %v528 = vsel %vm527, %v526, 0
  %vm529 = vcmp.lt.s32.totalorder %v528, 10
  %v530 = vsel %vm529, %v528, 10
  %v531 = vsub.s32 %v530, 1
  %vm532 = vcmp.gt.s32.totalorder %v531, 0
  %v533 = vsel %vm532, %v531, 0
  %v534 = vlaneseq
  %v535 = vshrl.u32 %v534, 7
  %v536 = vadd.s32 %v535, 8
  %v537 = vlaneseq
  %v538 = vshrl.u32 %v537, 7
  %v539 = vsub.s32 0, %v538
  %v540 = vrot.slane %v533, %v539
  %vm541 = vcmp.eq.s32.totalorder %v535, %v540
  %vm542 = vcmp.eq.s32.totalorder %v536, %v540
  %v543 = vsub.f32 1.0, %v525
  %v545 = vlaneseq
  %v546 = vshrl.u32 %v545, 7
  %v547 = vsub.s32 0, %v546
  %v548 = vrot.slane %v543, %v547
  %v550 = vsel %vm541, %v548, 0.0
  %v551 = vsel %vm542, %v548, 0.0
  %v552 = vlaneseq
  %v553 = vshrl.u32 %v552, 7
  %v554 = vsub.s32 0, %v553
  %v555 = vrot.slane %v530, %v554
  %vm556 = vcmp.eq.s32.totalorder %v535, %v555
  %vm557 = vcmp.eq.s32.totalorder %v536, %v555
  %v559 = vlaneseq
  %v560 = vshrl.u32 %v559, 7
  %v561 = vsub.s32 0, %v560
  %v562 = vrot.slane %v525, %v561
  %v564 = vsel %vm556, %v562, 0.0
  %v565 = vsel %vm557, %v562, 0.0
  %v566 = vadd.f32 %v550, %v564
  %v567 = vadd.f32 %v551, %v565
  %v568 = vmul.f32 %v520, %v566
  %v569 = vmul.f32 %v521, %v567
  %v570 = vsel %vm493, %v569, 0.0
  %v571 = vadd.f32 %v568, %v570
  %v572 = vrot.slane %v571, 4
  %v573 = vadd.f32 %v571, %v572
  %v574 = vrot.slane %v573, 2
  %v575 = vadd.f32 %v573, %v574
  %v576 = vrot.slane %v575, 1
  %v577 = vadd.f32 %v575, %v576
  %v579 = vlaneseq
  %v580 = vshrl.u32 %v579, 7
  %v581 = vsub.s32 0, %v580
  %v582 = vrot.slane %v39, %v581
  %vm584 = vcmp.eq.s32.totalorder %v535, 1
  %v585 = vsel %vm584, %v582, 1.0
  %vm586 = vcmp.eq.s32.totalorder %v535, 2
  %v587 = vmul.f32 %v582, %v582
  %v588 = vsel %vm586, %v587, %v585
  %vm589 = vcmp.eq.s32.totalorder %v535, 3
  %v590 = vsub.f32 %v582, 0.33333334
  %v591 = vmax.f32 %v590, 0.0
  %v592 = vmul.f32 %v591, %v591
  %v593 = vsel %vm589, %v592, %v588
  %vm594 = vcmp.eq.s32.totalorder %v535, 4
  %v595 = vsub.f32 %v582, 0.6666667
  %v596 = vmax.f32 %v595, 0.0
  %v597 = vmul.f32 %v596, %v596
  %v598 = vsel %vm594, %v597, %v593
  %v599 = vld [vmem:[%s8] sm:$0xff]
  %v600 = vld [vmem:[%s8 + $0x8] sm:$0xff]
  %v601 = vld [vmem:[%s8 + $0x10] sm:$0xff]
  %v602 = vld [vmem:[%s8 + $0x18] sm:$0xff]
  %604 = vset.pattern.permute.xlu0 0
  %605 = vperm.xlu0 %604, %v599
  %v606 = vpop.permute.xlu0 %605
  %609 = vset.pattern.permute.xlu0 0
  %610 = vperm.xlu0 %609, %v600
  %v611 = vpop.permute.xlu0 %610
  %614 = vset.pattern.permute.xlu0 0
  %615 = vperm.xlu0 %614, %v601
  %v616 = vpop.permute.xlu0 %615
  %619 = vset.pattern.permute.xlu0 0
  %620 = vperm.xlu0 %619, %v602
  %v621 = vpop.permute.xlu0 %620
  %v623 = vadd.f32 %v393, %v606
  %v624 = vadd.f32 %v396, %v611
  %v625 = vadd.f32 %v401, %v616
  %v626 = vadd.f32 %v404, %v621
  %v627 = vlaneseq
  %v628 = vshrl.u32 %v627, 7
  %v629 = vsub.s32 0, %v628
  %v630 = vrot.slane %v598, %v629
  %v631 = vmul.f32 %v630, %v623
  %v632 = vmul.f32 %v630, %v624
  %v633 = vmul.f32 %v630, %v625
  %v634 = vmul.f32 %v630, %v626
  %635 = vset.pattern.permute.xlu0 1
  %636 = vperm.xlu0 %635, %v599
  %v637 = vpop.permute.xlu0 %636
  %639 = vset.pattern.permute.xlu0 1
  %640 = vperm.xlu0 %639, %v600
  %v641 = vpop.permute.xlu0 %640
  %643 = vset.pattern.permute.xlu0 1
  %644 = vperm.xlu0 %643, %v601
  %v645 = vpop.permute.xlu0 %644
  %647 = vset.pattern.permute.xlu0 1
  %648 = vperm.xlu0 %647, %v602
  %v649 = vpop.permute.xlu0 %648
  %v651 = vadd.f32 %v409, %v637
  %v652 = vadd.f32 %v412, %v641
  %v653 = vadd.f32 %v417, %v645
  %v654 = vadd.f32 %v420, %v649
  %v655 = vlaneseq
  %v656 = vshrl.u32 %v655, 7
  %v657 = vsub.s32 1, %v656
  %v658 = vrot.slane %v598, %v657
  %v659 = vmul.f32 %v658, %v651
  %v660 = vmul.f32 %v658, %v652
  %v661 = vmul.f32 %v658, %v653
  %v662 = vmul.f32 %v658, %v654
  %v663 = vadd.f32 %v631, %v659
  %v664 = vadd.f32 %v632, %v660
  %v665 = vadd.f32 %v633, %v661
  %v666 = vadd.f32 %v634, %v662
  %667 = vset.pattern.permute.xlu0 2
  %668 = vperm.xlu0 %667, %v599
  %v669 = vpop.permute.xlu0 %668
  %671 = vset.pattern.permute.xlu0 2
  %672 = vperm.xlu0 %671, %v600
  %v673 = vpop.permute.xlu0 %672
  %675 = vset.pattern.permute.xlu0 2
  %676 = vperm.xlu0 %675, %v601
  %v677 = vpop.permute.xlu0 %676
  %679 = vset.pattern.permute.xlu0 2
  %680 = vperm.xlu0 %679, %v602
  %v681 = vpop.permute.xlu0 %680
  %v683 = vadd.f32 %v425, %v669
  %v684 = vadd.f32 %v428, %v673
  %v685 = vadd.f32 %v433, %v677
  %v686 = vadd.f32 %v436, %v681
  %v687 = vlaneseq
  %v688 = vshrl.u32 %v687, 7
  %v689 = vsub.s32 2, %v688
  %v690 = vrot.slane %v598, %v689
  %v691 = vmul.f32 %v690, %v683
  %v692 = vmul.f32 %v690, %v684
  %v693 = vmul.f32 %v690, %v685
  %v694 = vmul.f32 %v690, %v686
  %v695 = vadd.f32 %v663, %v691
  %v696 = vadd.f32 %v664, %v692
  %v697 = vadd.f32 %v665, %v693
  %v698 = vadd.f32 %v666, %v694
  %699 = vset.pattern.permute.xlu0 3
  %700 = vperm.xlu0 %699, %v599
  %v701 = vpop.permute.xlu0 %700
  %703 = vset.pattern.permute.xlu0 3
  %704 = vperm.xlu0 %703, %v600
  %v705 = vpop.permute.xlu0 %704
  %707 = vset.pattern.permute.xlu0 3
  %708 = vperm.xlu0 %707, %v601
  %v709 = vpop.permute.xlu0 %708
  %711 = vset.pattern.permute.xlu0 3
  %712 = vperm.xlu0 %711, %v602
  %v713 = vpop.permute.xlu0 %712
  %v715 = vadd.f32 %v441, %v701
  %v716 = vadd.f32 %v444, %v705
  %v717 = vadd.f32 %v449, %v709
  %v718 = vadd.f32 %v452, %v713
  %v719 = vlaneseq
  %v720 = vshrl.u32 %v719, 7
  %v721 = vsub.s32 3, %v720
  %v722 = vrot.slane %v598, %v721
  %v723 = vmul.f32 %v722, %v715
  %v724 = vmul.f32 %v722, %v716
  %v725 = vmul.f32 %v722, %v717
  %v726 = vmul.f32 %v722, %v718
  %v727 = vadd.f32 %v695, %v723
  %v728 = vadd.f32 %v696, %v724
  %v729 = vadd.f32 %v697, %v725
  %v730 = vadd.f32 %v698, %v726
  %731 = vset.pattern.permute.xlu0 4
  %732 = vperm.xlu0 %731, %v599
  %v733 = vpop.permute.xlu0 %732
  %735 = vset.pattern.permute.xlu0 4
  %736 = vperm.xlu0 %735, %v600
  %v737 = vpop.permute.xlu0 %736
  %739 = vset.pattern.permute.xlu0 4
  %740 = vperm.xlu0 %739, %v601
  %v741 = vpop.permute.xlu0 %740
  %743 = vset.pattern.permute.xlu0 4
  %744 = vperm.xlu0 %743, %v602
  %v745 = vpop.permute.xlu0 %744
  %v747 = vadd.f32 %v457, %v733
  %v748 = vadd.f32 %v460, %v737
  %v749 = vadd.f32 %v465, %v741
  %v750 = vadd.f32 %v468, %v745
  %v751 = vlaneseq
  %v752 = vshrl.u32 %v751, 7
  %v753 = vsub.s32 4, %v752
  %v754 = vrot.slane %v598, %v753
  %v755 = vmul.f32 %v754, %v747
  %v756 = vmul.f32 %v754, %v748
  %v757 = vmul.f32 %v754, %v749
  %v758 = vmul.f32 %v754, %v750
  %v759 = vadd.f32 %v727, %v755
  %v760 = vadd.f32 %v728, %v756
  %v761 = vadd.f32 %v729, %v757
  %v762 = vadd.f32 %v730, %v758
  %v763 = vmax.f32 %v759, 0.0
  %v764 = vmax.f32 %v760, 0.0
  %v765 = vmax.f32 %v761, 0.0
  %v766 = vmax.f32 %v762, 0.0
  %v767 = vld [vmem:[%s9] sm:$0x7]
  %v768 = vpack.c.bf16 %v764, %v763
  %v769 = vpack.c.bf16 %v766, %v765
  %v770 = vld [vmem:[%s10] sm:$0x1f]
  %772 = vset.pattern.permute.xlu0 0
  %773 = vperm.xlu0 %772, %v770
  %v774 = vpop.permute.xlu0 %773
  %v777 = vsel %vm186, %v767, 0
  %779 = vmatprep.subr.bf16.mxu0 0
  %780 = vmatpush1.bf16.msra.mxu0 %v768
  %781 = vmatprep.subr.bf16.mxu0 0
  %782 = vmatpush1.bf16.msra.mxu0 %v769
  %783 = vmatprep.subr.bf16.mxu0 0
  %784 = vmatpush1.bf16.msra.mxu0 0
  %785 = vmatprep.subr.bf16.mxu0 0
  %786 = vmatpush1.bf16.msra.mxu0 0
  %787 = vmatprep.subr.bf16.mxu0 0
  %788 = vmatpush1.bf16.msra.mxu0 0
  %789 = vmatprep.subr.bf16.mxu0 0
  %790 = vmatpush1.bf16.msra.mxu0 0
  %791 = vmatprep.subr.bf16.mxu0 0
  %792 = vmatpush1.bf16.msra.mxu0 0
  %793 = vmatprep.subr.bf16.mxu0 0
  %794 = vmatpush1.bf16.msra.mxu0 0
  %795 = vmatprep.subr.bf16.mxu0 0
  %796 = vmatpush1.bf16.msra.mxu0 0
  %797 = vmatprep.subr.bf16.mxu0 0
  %798 = vmatpush1.bf16.msra.mxu0 0
  %799 = vmatprep.subr.bf16.mxu0 0
  %800 = vmatpush1.bf16.msra.mxu0 0
  %801 = vmatprep.subr.bf16.mxu0 0
  %802 = vmatpush1.bf16.msra.mxu0 0
  %803 = vmatprep.subr.bf16.mxu0 0
  %804 = vmatpush1.bf16.msra.mxu0 0
  %805 = vmatprep.subr.bf16.mxu0 0
  %806 = vmatpush1.bf16.msra.mxu0 0
  %807 = vmatprep.subr.bf16.mxu0 0
  %808 = vmatpush1.bf16.msra.mxu0 0
  %809 = vmatprep.subr.bf16.mxu0 0
  %810 = vmatpush1.bf16.msra.mxu0 0
  %811 = vmatprep.mubr.bf16.mxu0 0
  %812 = vmatmul.mubr.bf16.gmra.mrb[0].mxu0 %v777
  %v813 = vpop.f32.mrb[0].mxu0
  %v814 = vadd.f32 %v774, %v813
  %v815 = vpop.f32.mrb[0].mxu0
  %v816 = vpop.f32.mrb[0].mxu0
  %v817 = vpop.f32.mrb[0].mxu0
  %818 = vdwg.mxu0
  %v819 = vmul.f32 %v598, %v814
  %vm820 = vcmask 1044480
  %v821 = vsel %vm820, %v819, 0.0
  %v822 = vrot.slane %v821, 4
  %v823 = vadd.f32 %v821, %v822
  %v824 = vrot.slane %v823, 2
  %v825 = vadd.f32 %v823, %v824
  %v826 = vrot.slane %v825, 1
  %v827 = vadd.f32 %v825, %v826
  %828 = vst [vmem:[%s11] sm:$0x1] %v577
  %829 = vst [vmem:[%s11 + $0x1] sm:$0x1] %v827
  // Predicated region
  $region46: #{vcnet_forward.1} parent=0 // pred_check
    _
  $region47: #{vcnet_forward.1} parent=0 // pred_check_branch
    %831 = sbr.rel (0) target = $region49
  $region48: #{vcnet_forward.1} parent=0 // pred_region
    _
  $region49: #{vcnet_forward.1} parent=0 // pred_fallthru
    _
  // Predicated region
  $region50: #{vcnet_forward.1} parent=0 // pred_check
    _
  $region51: #{vcnet_forward.1} parent=0 // pred_check_branch
    %833 = sbr.rel (0) target = $region53
  $region52: #{vcnet_forward.1} parent=0 // pred_region
    _
  $region53: #{vcnet_forward.1} parent=0 // pred_fallthru
    _

</llo_original>
